<compile_context>
chip_gen: v5e
topology: v5e:2x2
jax: 0.10.0
libtpu: 0.0.40
codegen_flags: <defaults>
</compile_context>

<pallas_src>
import functools
import math

import jax
import jax.numpy as jnp
from jax.experimental import pallas as pl
from jax.experimental.pallas import tpu as pltpu


def gcn_branch_kernel(x_ref, adjr_ref, w1_ref, b1_ref, w2_ref, b2_ref,
                      mask_ref, bn_scale_ref, bn_shift_ref,
                      l1w_ref, l1b_ref, l2w_ref, l2b_ref, out_ref,
                      *, num_relations, num_nodes, num_branches):
    """Whole forward pass in one kernel (everything fits VMEM at these sizes)."""
    R, N = num_relations, num_nodes

    def rgcn_layer(h_f32, w_ref, b_ref):
        # One matmul for all relation aggregations: adj_rows is [R*N, N] with
        # A_r in rows r*N:(r+1)*N, so AH = [A_0@h ; A_1@h ; ...].
        h_bf = h_f32.astype(jnp.bfloat16)
        ah = jnp.dot(adjr_ref[...], h_bf,
                     preferred_element_type=jnp.float32)          # [R*N, C]
        # One matmul for root + all relation transforms:
        # [h | A_0@h | ... ] @ [W_root ; W_0 ; ...]
        parts = [h_f32] + [ah[r * N:(r + 1) * N, :] for r in range(R)]
        h_aug = jnp.concatenate(parts, axis=-1).astype(jnp.bfloat16)
        out = jnp.dot(h_aug, w_ref[...],
                      preferred_element_type=jnp.float32) + b_ref[...]
        return out

    x = x_ref[...].astype(jnp.float32)

    h1 = jnp.maximum(rgcn_layer(x, w1_ref, b1_ref), 0.0)          # RGCN 1 + ReLU
    h2 = jnp.maximum(rgcn_layer(h1, w2_ref, b2_ref), 0.0)         # RGCN 2 + ReLU

    # global_max_pool, vectorized. Exact because h2 >= 0 after ReLU: masked-out
    # nodes contribute 0 <= per-graph max. (Documented per review.)
    mask = mask_ref[...]                                          # [G, N]
    pooled = jnp.max(mask[:, :, None] * h2[None, :, :], axis=1)   # [G, H2]

    # All branches share the same conv weights in the original forward(), so the
    # concatenated features are num_branches identical copies.
    feats = jnp.concatenate([pooled] * num_branches, axis=-1)     # [G, B*H2]

    # BatchNorm1d (inference), pre-folded to per-feature scale & shift.
    feats = feats * bn_scale_ref[...] + bn_shift_ref[...]

    # Linear 1 + ReLU
    h3 = jnp.maximum(
        jnp.dot(feats.astype(jnp.bfloat16), l1w_ref[...],
                preferred_element_type=jnp.float32) + l1b_ref[...], 0.0)
    # Linear 2 (lane-padded to 128 output columns; wrapper slices them off).
    logits = jnp.dot(h3.astype(jnp.bfloat16), l2w_ref[...],
                     preferred_element_type=jnp.float32) + l2b_ref[...]
    out_ref[...] = logits.astype(out_ref.dtype)


def build_adjacency(edge_index, edge_type, num_nodes, num_relations):
    """Dense per-relation adjacency with mean normalization (PyG RGCNConv aggr='mean').

    A[r, i, j] = 1/deg_r(i) for every edge j->i of relation r; rows with no
    incoming edges of relation r stay zero.
    """
    src = edge_index[0]
    dst = edge_index[1]
    adj = jnp.zeros((num_relations, num_nodes, num_nodes), jnp.float32)
    adj = adj.at[edge_type, dst, src].add(1.0)
    deg = adj.sum(axis=-1, keepdims=True)
    return adj / jnp.maximum(deg, 1.0)


@functools.partial(jax.jit, static_argnames=(
    "num_relations", "num_graphs", "num_branches", "num_classes"))
def gcn_branch_forward(x, edge_index, edge_type, batch, params, *,
                       num_relations, num_graphs, num_branches, num_classes):
    num_nodes, input_size = x.shape
    hidden1 = params["w1_root"].shape[1]
    hidden2 = params["w2_root"].shape[1]
    feat_dim = num_branches * hidden2
    lin_hidden = params["l1_w"].shape[1]
    LANE = 128
    pad_classes = ((num_classes + LANE - 1) // LANE) * LANE

    bf16 = jnp.bfloat16

    # --- glue fused into the same jit as the pallas_call ---
    adj = build_adjacency(edge_index, edge_type, num_nodes, num_relations)
    adj_rows = adj.reshape(num_relations * num_nodes, num_nodes)   # [R*N, N]
    pool_mask = (batch[None, :] ==
                 jnp.arange(num_graphs)[:, None]).astype(jnp.float32)

    w1_big = jnp.concatenate(
        [params["w1_root"]] + [params["w1_rel"][r] for r in range(num_relations)],
        axis=0)                                                    # [(R+1)*Cin, H1]
    w2_big = jnp.concatenate(
        [params["w2_root"]] + [params["w2_rel"][r] for r in range(num_relations)],
        axis=0)                                                    # [(R+1)*H1, H2]

    eps = 1e-5
    scale_vec = params["bn_gamma"] / jnp.sqrt(params["bn_var"] + eps)
    shift_vec = params["bn_beta"] - params["bn_mean"] * scale_vec
    bn_scale = scale_vec.reshape(1, feat_dim).astype(jnp.float32)
    bn_shift = shift_vec.reshape(1, feat_dim).astype(jnp.float32)

    l2_w_pad = jnp.zeros((lin_hidden, pad_classes), jnp.float32
                         ).at[:, :num_classes].set(params["l2_w"])
    l2_b_pad = jnp.zeros((1, pad_classes), jnp.float32
                         ).at[:, :num_classes].set(params["l2_b"])

    inputs = (
        x.astype(bf16),
        adj_rows.astype(bf16),
        w1_big.astype(bf16), params["b1"].astype(jnp.float32),
        w2_big.astype(bf16), params["b2"].astype(jnp.float32),
        pool_mask,
        bn_scale, bn_shift,
        params["l1_w"].astype(bf16), params["l1_b"].astype(jnp.float32),
        l2_w_pad.astype(bf16), l2_b_pad,
    )

    flops = 2 * (
        num_relations * num_nodes * num_nodes * input_size
        + num_nodes * (num_relations + 1) * input_size * hidden1
        + num_relations * num_nodes * num_nodes * hidden1
        + num_nodes * (num_relations + 1) * hidden1 * hidden2
        + num_graphs * feat_dim * lin_hidden
        + num_graphs * lin_hidden * pad_classes)
    bytes_accessed = (sum(math.prod(a.shape) * a.dtype.itemsize for a in inputs)
                      + num_graphs * pad_classes * 4)

    kernel = functools.partial(gcn_branch_kernel,
                               num_relations=num_relations,
                               num_nodes=num_nodes,
                               num_branches=num_branches)
    vmem_spec = pl.BlockSpec(memory_space=pltpu.MemorySpace.VMEM)
    out = pl.pallas_call(
        kernel,
        out_shape=jax.ShapeDtypeStruct((num_graphs, pad_classes), jnp.float32),
        in_specs=[vmem_spec] * len(inputs),
        out_specs=vmem_spec,
        cost_estimate=pl.CostEstimate(flops=flops, transcendentals=0,
                                      bytes_accessed=bytes_accessed),
    )(*inputs)
    return out[:, :num_classes]


def reference_forward(x, edge_index, edge_type, batch, params, *,
                      num_relations, num_graphs, num_branches):
    """Pure-JAX reference mirroring the kernel's bf16 operand rounding."""
    def bf(v):
        return v.astype(jnp.bfloat16).astype(jnp.float32)

    N = x.shape[0]
    adj = build_adjacency(edge_index, edge_type, N, num_relations)
    adj_rows = bf(adj.reshape(num_relations * N, N))
    pool_mask = batch[None, :] == jnp.arange(num_graphs)[:, None]

    def rgcn(h, wrel, wroot, b):
        ah = adj_rows @ bf(h)
        parts = [h] + [ah[r * N:(r + 1) * N] for r in range(num_relations)]
        h_aug = bf(jnp.concatenate(parts, axis=-1))
        w_big = bf(jnp.concatenate([wroot] + [wrel[r] for r in range(num_relations)],
                                   axis=0))
        return h_aug @ w_big + b

    h1 = jnp.maximum(rgcn(bf(x), params["w1_rel"], params["w1_root"], params["b1"]), 0.0)
    h2 = jnp.maximum(rgcn(h1, params["w2_rel"], params["w2_root"], params["b2"]), 0.0)

    masked = jnp.where(pool_mask[:, :, None], h2[None, :, :], -1e30)
    pooled = jnp.max(masked, axis=1)                               # [G, H2]
    feats = jnp.concatenate([pooled] * num_branches, axis=-1)      # [G, B*H2]

    eps = 1e-5
    scale = params["bn_gamma"] / jnp.sqrt(params["bn_var"] + eps)
    feats = (feats - params["bn_mean"]) * scale + params["bn_beta"]

    h3 = jnp.maximum(bf(feats) @ bf(params["l1_w"]) + params["l1_b"], 0.0)
    return bf(h3) @ bf(params["l2_w"]) + params["l2_b"]


if __name__ == "__main__":
    # Module-consistent sizes: GCN_branch_Model hardcodes multiplier=4, 4 branches.
    input_size = 4
    num_relations = 2
    num_classes = 3
    multiplier = 4
    num_branches = 4
    hidden1 = 8 * multiplier          # 32
    hidden2 = 16 * multiplier         # 64
    feat_dim = num_branches * hidden2 # 256
    lin_hidden = 8 * num_branches * multiplier  # 128

    num_nodes = 16
    num_edges = 32
    num_graphs = 2

    key = jax.random.PRNGKey(0)
    keys = jax.random.split(key, 18)

    # Graph data (data.x, data.edge_index, data.edge_attr[:, 0], data.batch)
    x = jax.random.normal(keys[0], (num_nodes, input_size), jnp.float32)
    src = jax.random.randint(keys[1], (num_edges,), 0, num_nodes)
    dst = jax.random.randint(keys[2], (num_edges,), 0, num_nodes)
    edge_index = jnp.stack([src, dst], axis=0)
    edge_type = jax.random.randint(keys[3], (num_edges,), 0, num_relations)
    batch = jnp.concatenate([jnp.zeros(num_nodes // 2, jnp.int32),
                             jnp.ones(num_nodes - num_nodes // 2, jnp.int32)])

    def init(k, shape, scale=0.2):
        return scale * jax.random.normal(k, shape, jnp.float32)

    params = {
        "w1_rel":   init(keys[4], (num_relations, input_size, hidden1)),
        "w1_root":  init(keys[5], (input_size, hidden1)),
        "b1":       init(keys[6], (1, hidden1)),
        "w2_rel":   init(keys[7], (num_relations, hidden1, hidden2)),
        "w2_root":  init(keys[8], (hidden1, hidden2)),
        "b2":       init(keys[9], (1, hidden2)),
        "bn_gamma": 1.0 + 0.1 * jax.random.normal(keys[10], (feat_dim,), jnp.float32),
        "bn_beta":  0.1 * jax.random.normal(keys[11], (feat_dim,), jnp.float32),
        "bn_mean":  0.1 * jax.random.normal(keys[12], (feat_dim,), jnp.float32),
        "bn_var":   0.9 + jnp.abs(0.2 * jax.random.normal(keys[13], (feat_dim,), jnp.float32)),
        "l1_w":     init(keys[14], (feat_dim, lin_hidden)),
        "l1_b":     init(keys[15], (1, lin_hidden)),
        "l2_w":     init(keys[16], (lin_hidden, num_classes)),
        "l2_b":     init(keys[17], (1, num_classes)),
    }

    out = gcn_branch_forward(x, edge_index, edge_type, batch, params,
                             num_relations=num_relations, num_graphs=num_graphs,
                             num_branches=num_branches, num_classes=num_classes)
    out = jax.block_until_ready(out)

    ref = reference_forward(x, edge_index, edge_type, batch, params,
                            num_relations=num_relations, num_graphs=num_graphs,
                            num_branches=num_branches)
    assert out.shape == (num_graphs, num_classes)
    assert jnp.allclose(out, ref, atol=5e-3, rtol=5e-3), (out, ref)

    print("KERNEL_OK")
</pallas_src>

<mosaic_0001>
module attributes {stable_mosaic.version = 11 : i64} {
  func.func @gcn_branch_kernel(%arg0: memref<16x4xbf16, #tpu.memory_space<vmem>>, %arg1: memref<32x16xbf16, #tpu.memory_space<vmem>>, %arg2: memref<12x32xbf16, #tpu.memory_space<vmem>>, %arg3: memref<1x32xf32, #tpu.memory_space<vmem>>, %arg4: memref<96x64xbf16, #tpu.memory_space<vmem>>, %arg5: memref<1x64xf32, #tpu.memory_space<vmem>>, %arg6: memref<2x16xf32, #tpu.memory_space<vmem>>, %arg7: memref<1x256xf32, #tpu.memory_space<vmem>>, %arg8: memref<1x256xf32, #tpu.memory_space<vmem>>, %arg9: memref<256x128xbf16, #tpu.memory_space<vmem>>, %arg10: memref<1x128xf32, #tpu.memory_space<vmem>>, %arg11: memref<128x128xbf16, #tpu.memory_space<vmem>>, %arg12: memref<1x128xf32, #tpu.memory_space<vmem>>, %arg13: memref<2x128xf32, #tpu.memory_space<vmem>>) attributes {dimension_semantics = [], scalar_prefetch = 0 : i64, scratch_operands = 0 : i64, tpu.core_type = #tpu.core_type<tc>} {
    %c0 = arith.constant 0 : index
    %c0_0 = arith.constant 0 : index
    %0 = vector.load %arg0[%c0, %c0_0] : memref<16x4xbf16, #tpu.memory_space<vmem>>, vector<16x4xbf16>
    %1 = arith.extf %0 : vector<16x4xbf16> to vector<16x4xf32>
    %2 = arith.truncf %1 : vector<16x4xf32> to vector<16x4xbf16>
    %c0_1 = arith.constant 0 : index
    %c0_2 = arith.constant 0 : index
    %3 = vector.load %arg1[%c0_1, %c0_2] : memref<32x16xbf16, #tpu.memory_space<vmem>>, vector<32x16xbf16>
    %cst = arith.constant dense<0.000000e+00> : vector<32x4xf32>
    %4 = tpu.matmul %3, %2, %cst {dimension_numbers = #tpu.dot_dimension_numbers<[1], [0], [0], [1], [0, 0, 1, 1], [], []>} : vector<32x16xbf16>, vector<16x4xbf16>, vector<32x4xf32> -> vector<32x4xf32>
    %5 = vector.extract_strided_slice %4 {offsets = [0, 0], sizes = [16, 4], strides = [1, 1]} : vector<32x4xf32> to vector<16x4xf32>
    %6 = vector.extract_strided_slice %4 {offsets = [16, 0], sizes = [16, 4], strides = [1, 1]} : vector<32x4xf32> to vector<16x4xf32>
    %7 = tpu.concatenate %1, %5, %6 in 1 : vector<16x4xf32>, vector<16x4xf32>, vector<16x4xf32> -> vector<16x12xf32>
    %8 = arith.truncf %7 : vector<16x12xf32> to vector<16x12xbf16>
    %c0_3 = arith.constant 0 : index
    %c0_4 = arith.constant 0 : index
    %9 = vector.load %arg2[%c0_3, %c0_4] : memref<12x32xbf16, #tpu.memory_space<vmem>>, vector<12x32xbf16>
    %cst_5 = arith.constant dense<0.000000e+00> : vector<16x32xf32>
    %10 = tpu.matmul %8, %9, %cst_5 {dimension_numbers = #tpu.dot_dimension_numbers<[1], [0], [0], [1], [0, 0, 1, 1], [], []>} : vector<16x12xbf16>, vector<12x32xbf16>, vector<16x32xf32> -> vector<16x32xf32>
    %c0_6 = arith.constant 0 : index
    %c0_7 = arith.constant 0 : index
    %11 = vector.load %arg3[%c0_6, %c0_7] : memref<1x32xf32, #tpu.memory_space<vmem>>, vector<1x32xf32>
    %12 = vector.broadcast %11 : vector<1x32xf32> to vector<16x32xf32>
    %13 = arith.addf %10, %12 : vector<16x32xf32>
    %cst_8 = arith.constant 0.000000e+00 : f32
    %14 = vector.broadcast %cst_8 : f32 to vector<16x32xf32>
    %15 = arith.maximumf %13, %14 : vector<16x32xf32>
    %16 = arith.truncf %15 : vector<16x32xf32> to vector<16x32xbf16>
    %c0_9 = arith.constant 0 : index
    %c0_10 = arith.constant 0 : index
    %17 = vector.load %arg1[%c0_9, %c0_10] : memref<32x16xbf16, #tpu.memory_space<vmem>>, vector<32x16xbf16>
    %cst_11 = arith.constant dense<0.000000e+00> : vector<32x32xf32>
    %18 = tpu.matmul %17, %16, %cst_11 {dimension_numbers = #tpu.dot_dimension_numbers<[1], [0], [0], [1], [0, 0, 1, 1], [], []>} : vector<32x16xbf16>, vector<16x32xbf16>, vector<32x32xf32> -> vector<32x32xf32>
    %19 = vector.extract_strided_slice %18 {offsets = [0, 0], sizes = [16, 32], strides = [1, 1]} : vector<32x32xf32> to vector<16x32xf32>
    %20 = vector.extract_strided_slice %18 {offsets = [16, 0], sizes = [16, 32], strides = [1, 1]} : vector<32x32xf32> to vector<16x32xf32>
    %21 = tpu.concatenate %15, %19, %20 in 1 : vector<16x32xf32>, vector<16x32xf32>, vector<16x32xf32> -> vector<16x96xf32>
    %22 = arith.truncf %21 : vector<16x96xf32> to vector<16x96xbf16>
    %c0_12 = arith.constant 0 : index
    %c0_13 = arith.constant 0 : index
    %23 = vector.load %arg4[%c0_12, %c0_13] : memref<96x64xbf16, #tpu.memory_space<vmem>>, vector<96x64xbf16>
    %cst_14 = arith.constant dense<0.000000e+00> : vector<16x64xf32>
    %24 = tpu.matmul %22, %23, %cst_14 {dimension_numbers = #tpu.dot_dimension_numbers<[1], [0], [0], [1], [0, 0, 1, 1], [], []>} : vector<16x96xbf16>, vector<96x64xbf16>, vector<16x64xf32> -> vector<16x64xf32>
    %c0_15 = arith.constant 0 : index
    %c0_16 = arith.constant 0 : index
    %25 = vector.load %arg5[%c0_15, %c0_16] : memref<1x64xf32, #tpu.memory_space<vmem>>, vector<1x64xf32>
    %26 = vector.broadcast %25 : vector<1x64xf32> to vector<16x64xf32>
    %27 = arith.addf %24, %26 : vector<16x64xf32>
    %cst_17 = arith.constant 0.000000e+00 : f32
    %28 = vector.broadcast %cst_17 : f32 to vector<16x64xf32>
    %29 = arith.maximumf %27, %28 : vector<16x64xf32>
    %c0_18 = arith.constant 0 : index
    %c0_19 = arith.constant 0 : index
    %30 = vector.load %arg6[%c0_18, %c0_19] : memref<2x16xf32, #tpu.memory_space<vmem>>, vector<2x16xf32>
    %31 = vector.shape_cast %30 : vector<2x16xf32> to vector<2x16x1xf32>
    %32 = vector.shape_cast %29 : vector<16x64xf32> to vector<1x16x64xf32>
    %33 = vector.broadcast %31 : vector<2x16x1xf32> to vector<2x16x64xf32>
    %34 = vector.broadcast %32 : vector<1x16x64xf32> to vector<2x16x64xf32>
    %35 = arith.mulf %33, %34 : vector<2x16x64xf32>
    %cst_20 = arith.constant dense<0xFF800000> : vector<2x64xf32>
    %36 = vector.multi_reduction <maximumf>, %35, %cst_20 [1] : vector<2x16x64xf32> to vector<2x64xf32>
    %37 = tpu.concatenate %36, %36, %36, %36 in 1 : vector<2x64xf32>, vector<2x64xf32>, vector<2x64xf32>, vector<2x64xf32> -> vector<2x256xf32>
    %c0_21 = arith.constant 0 : index
    %c0_22 = arith.constant 0 : index
    %38 = vector.load %arg7[%c0_21, %c0_22] : memref<1x256xf32, #tpu.memory_space<vmem>>, vector<1x256xf32>
    %39 = vector.broadcast %38 : vector<1x256xf32> to vector<2x256xf32>
    %40 = arith.mulf %37, %39 : vector<2x256xf32>
    %c0_23 = arith.constant 0 : index
    %c0_24 = arith.constant 0 : index
    %41 = vector.load %arg8[%c0_23, %c0_24] : memref<1x256xf32, #tpu.memory_space<vmem>>, vector<1x256xf32>
    %42 = vector.broadcast %41 : vector<1x256xf32> to vector<2x256xf32>
    %43 = arith.addf %40, %42 : vector<2x256xf32>
    %44 = arith.truncf %43 : vector<2x256xf32> to vector<2x256xbf16>
    %c0_25 = arith.constant 0 : index
    %c0_26 = arith.constant 0 : index
    %45 = vector.load %arg9[%c0_25, %c0_26] : memref<256x128xbf16, #tpu.memory_space<vmem>>, vector<256x128xbf16>
    %cst_27 = arith.constant dense<0.000000e+00> : vector<2x128xf32>
    %46 = tpu.matmul %44, %45, %cst_27 {dimension_numbers = #tpu.dot_dimension_numbers<[1], [0], [0], [1], [0, 0, 1, 1], [], []>} : vector<2x256xbf16>, vector<256x128xbf16>, vector<2x128xf32> -> vector<2x128xf32>
    %c0_28 = arith.constant 0 : index
    %c0_29 = arith.constant 0 : index
    %47 = vector.load %arg10[%c0_28, %c0_29] : memref<1x128xf32, #tpu.memory_space<vmem>>, vector<1x128xf32>
    %48 = vector.broadcast %47 : vector<1x128xf32> to vector<2x128xf32>
    %49 = arith.addf %46, %48 : vector<2x128xf32>
    %cst_30 = arith.constant 0.000000e+00 : f32
    %50 = vector.broadcast %cst_30 : f32 to vector<2x128xf32>
    %51 = arith.maximumf %49, %50 : vector<2x128xf32>
    %52 = arith.truncf %51 : vector<2x128xf32> to vector<2x128xbf16>
    %c0_31 = arith.constant 0 : index
    %c0_32 = arith.constant 0 : index
    %53 = vector.load %arg11[%c0_31, %c0_32] : memref<128x128xbf16, #tpu.memory_space<vmem>>, vector<128x128xbf16>
    %cst_33 = arith.constant dense<0.000000e+00> : vector<2x128xf32>
    %54 = tpu.matmul %52, %53, %cst_33 {dimension_numbers = #tpu.dot_dimension_numbers<[1], [0], [0], [1], [0, 0, 1, 1], [], []>} : vector<2x128xbf16>, vector<128x128xbf16>, vector<2x128xf32> -> vector<2x128xf32>
    %c0_34 = arith.constant 0 : index
    %c0_35 = arith.constant 0 : index
    %55 = vector.load %arg12[%c0_34, %c0_35] : memref<1x128xf32, #tpu.memory_space<vmem>>, vector<1x128xf32>
    %56 = vector.broadcast %55 : vector<1x128xf32> to vector<2x128xf32>
    %57 = arith.addf %54, %56 : vector<2x128xf32>
    %c0_36 = arith.constant 0 : index
    %c0_37 = arith.constant 0 : index
    %58 = vector.load %arg13[%c0_36, %c0_37] : memref<2x128xf32, #tpu.memory_space<vmem>>, vector<2x128xf32>
    tpu.vector_store %arg13[%c0_36, %c0_37], %57 {strides = array<i32>} : memref<2x128xf32, #tpu.memory_space<vmem>>, vector<2x128xf32>,
    return
  }
}

</mosaic_0001>

<llo_original>
// kernel: gcn_branch_forward.1
$region0: #{gcn_branch_forward.1}
  #allocation0 [shape = 'u32[]', space=smem, size = 0x4, offset = 0x4, fixed_abs, tag = 'smem constant byte address 0x4 - core index']
  #allocation1 [shape = 'u32[72,128]{1,0:T(1,128)}', space=vmem, size = 0x9000, scoped, tag = 'internal scratch']
  %s0 = inlined_call_operand.vmem [shape: bf16[16,4], index: 0, kind: input, shape index: {}]
  %s1 = inlined_call_operand.vmem [shape: bf16[32,16], index: 1, kind: input, shape index: {}]
  %s2 = inlined_call_operand.vmem [shape: bf16[12,32], index: 2, kind: input, shape index: {}]
  %s3 = inlined_call_operand.vmem [shape: f32[1,32], index: 3, kind: input, shape index: {}]
  %s4 = inlined_call_operand.vmem [shape: bf16[96,64], index: 4, kind: input, shape index: {}]
  %s5 = inlined_call_operand.vmem [shape: f32[1,64], index: 5, kind: input, shape index: {}]
  %s6 = inlined_call_operand.vmem [shape: f32[2,16], index: 6, kind: input, shape index: {}]
  %s7 = inlined_call_operand.vmem [shape: f32[1,256], index: 7, kind: input, shape index: {}]
  %s8 = inlined_call_operand.vmem [shape: f32[1,256], index: 8, kind: input, shape index: {}]
  %s9 = inlined_call_operand.vmem [shape: bf16[256,128], index: 9, kind: input, shape index: {}]
  %s10 = inlined_call_operand.vmem [shape: f32[1,128], index: 10, kind: input, shape index: {}]
  %s11 = inlined_call_operand.vmem [shape: bf16[128,128], index: 11, kind: input, shape index: {}]
  %s12 = inlined_call_operand.vmem [shape: f32[1,128], index: 12, kind: input, shape index: {}]
  %s13 = inlined_call_operand.hbm [shape: f32[2,128], index: 13, kind: output, shape index: {}]
  %s14 = sld [smem:[#allocation0]]
  $region62: #{gcn_branch_forward.1} parent=0
    _
  %s16 = ssub.s32 1, %s14
  %s17 = scalar_select 0, %s16, %s14
  $region1: #{gcn_branch_forward.1} parent=0
    #allocation2 [shape = 'u8[1024]{0}', space=vmem, size = 0x400, scoped, tag = 'output window, operand 0, single buffered']
    #allocation3 [shape = 's32[1]{0}', space=sflag, size = 0x4, scoped, tag = 'scoped memory for gcn_branch_forward.1']
    %18 = vsyncpa [#allocation3], 0
    // Predicated region
    $region2: #{gcn_branch_forward.1} parent=1 // pred_check
      _
    $region3: #{gcn_branch_forward.1} parent=1 // pred_check_branch
      %20 = sbr.rel (0) target = $region5
    $region4: #{gcn_branch_forward.1} parent=1 // pred_region
      _
    $region5: #{gcn_branch_forward.1} parent=1 // pred_fallthru
      _
    // Predicated region
    $region6: #{gcn_branch_forward.1} parent=1 // pred_check
      _
    $region7: #{gcn_branch_forward.1} parent=1 // pred_check_branch
      %22 = sbr.rel (0) target = $region9
    $region8: #{gcn_branch_forward.1} parent=1 // pred_region
      _
    $region9: #{gcn_branch_forward.1} parent=1 // pred_fallthru
      _
    // Predicated region
    $region10: #{gcn_branch_forward.1} parent=1 // pred_check
      _
    $region11: #{gcn_branch_forward.1} parent=1 // pred_check_branch
      %24 = sbr.rel (0) target = $region13
    $region12: #{gcn_branch_forward.1} parent=1 // pred_region
      _
    $region13: #{gcn_branch_forward.1} parent=1 // pred_fallthru
      _
    // Predicated region
    $region14: #{gcn_branch_forward.1} parent=1 // pred_check
      _
    $region15: #{gcn_branch_forward.1} parent=1 // pred_check_branch
      %26 = sbr.rel (0) target = $region17
    $region16: #{gcn_branch_forward.1} parent=1 // pred_region
      _
    $region17: #{gcn_branch_forward.1} parent=1 // pred_fallthru
      _
    // Predicated region
    $region18: #{gcn_branch_forward.1} parent=1 // pred_check
      _
    $region19: #{gcn_branch_forward.1} parent=1 // pred_check_branch
      %28 = sbr.rel (0) target = $region21
    $region20: #{gcn_branch_forward.1} parent=1 // pred_region
      _
    $region21: #{gcn_branch_forward.1} parent=1 // pred_fallthru
      _
    // Predicated region
    $region22: #{gcn_branch_forward.1} parent=1 // pred_check
      _
    $region23: #{gcn_branch_forward.1} parent=1 // pred_check_branch
      %30 = sbr.rel (0) target = $region25
    $region24: #{gcn_branch_forward.1} parent=1 // pred_region
      _
    $region25: #{gcn_branch_forward.1} parent=1 // pred_fallthru
      _
    // Predicated region
    $region26: #{gcn_branch_forward.1} parent=1 // pred_check
      _
    $region27: #{gcn_branch_forward.1} parent=1 // pred_check_branch
      %32 = sbr.rel (0) target = $region29
    $region28: #{gcn_branch_forward.1} parent=1 // pred_region
      _
    $region29: #{gcn_branch_forward.1} parent=1 // pred_fallthru
      _
    // Predicated region
    $region30: #{gcn_branch_forward.1} parent=1 // pred_check
      _
    $region31: #{gcn_branch_forward.1} parent=1 // pred_check_branch
      %34 = sbr.rel (0) target = $region33
    $region32: #{gcn_branch_forward.1} parent=1 // pred_region
      _
    $region33: #{gcn_branch_forward.1} parent=1 // pred_fallthru
      _
    // Predicated region
    $region34: #{gcn_branch_forward.1} parent=1 // pred_check
      _
    $region35: #{gcn_branch_forward.1} parent=1 // pred_check_branch
      %36 = sbr.rel (0) target = $region37
    $region36: #{gcn_branch_forward.1} parent=1 // pred_region
      _
    $region37: #{gcn_branch_forward.1} parent=1 // pred_fallthru
      _
    // Predicated region
    $region38: #{gcn_branch_forward.1} parent=1 // pred_check
      _
    $region39: #{gcn_branch_forward.1} parent=1 // pred_check_branch
      %38 = sbr.rel (0) target = $region41
    $region40: #{gcn_branch_forward.1} parent=1 // pred_region
      _
    $region41: #{gcn_branch_forward.1} parent=1 // pred_fallthru
      _
    // Predicated region
    $region42: #{gcn_branch_forward.1} parent=1 // pred_check
      _
    $region43: #{gcn_branch_forward.1} parent=1 // pred_check_branch
      %40 = sbr.rel (0) target = $region45
    $region44: #{gcn_branch_forward.1} parent=1 // pred_region
      _
    $region45: #{gcn_branch_forward.1} parent=1 // pred_fallthru
      _
    // Predicated region
    $region46: #{gcn_branch_forward.1} parent=1 // pred_check
      _
    $region47: #{gcn_branch_forward.1} parent=1 // pred_check_branch
      %42 = sbr.rel (0) target = $region49
    $region48: #{gcn_branch_forward.1} parent=1 // pred_region
      _
    $region49: #{gcn_branch_forward.1} parent=1 // pred_fallthru
      _
    // Predicated region
    $region50: #{gcn_branch_forward.1} parent=1 // pred_check
      _
    $region51: #{gcn_branch_forward.1} parent=1 // pred_check_branch
      %44 = sbr.rel (0) target = $region53
    $region52: #{gcn_branch_forward.1} parent=1 // pred_region
      _
    $region53: #{gcn_branch_forward.1} parent=1 // pred_fallthru
      _
    %v46 = vld [vmem:[%s0] sm:$0xf]
    %v47 = vld [vmem:[%s0 + $0x4] sm:$0xf]
    %v48 = vunpack.c.l.bf16 %v46
    %v49 = vunpack.c.l.bf16 %v47
    %v50 = vld [vmem:[%s1] sm:$0xf]
    %v51 = vld [vmem:[%s1 + $0x4] sm:$0xf]
    %v52 = vld [vmem:[%s1 + $0x8] sm:$0xf]
    %v53 = vld [vmem:[%s1 + $0xc] sm:$0xf]
    %v58 = vunpack.c.l.b16 %v50
    %v59 = vunpack.c.l.b16 %v51
    %v60 = vunpack.c.l.b16 %v52
    %v61 = vunpack.c.l.b16 %v53
    %v62 = vpack.c.b16 %v59, %v58
    %v63 = vpack.c.b16 %v61, %v60
    %v66 = vunpack.c.l.b16 %v46
    %v67 = vunpack.c.l.b16 %v47
    %v68 = vpack.c.b16 %v67, %v66
    %vm70 = vcmask 130048
    %v72 = vsel %vm70, %v62, 0
    %v75 = vsel %vm70, %v63, 0
    %77 = vmatpush.bf16.msra.mxu0 0
    %78 = vmatpush.bf16.msra.mxu0 0
    %79 = vmatpush.bf16.msra.mxu0 0
    %80 = vmatpush.bf16.msra.mxu0 0
    %81 = vmatpush.bf16.msra.mxu0 0
    %82 = vmatpush.bf16.msra.mxu0 0
    %83 = vmatpush.bf16.msra.mxu0 0
    %84 = vmatpush.bf16.msra.mxu0 %v68
    %85 = vmatmul.bf16.gmra.mxu0 %v72
    %v86 = vpop.f32.mrf.mxu0
    %v87 = vadd.f32 0.0, %v86
    %v88 = vpop.f32.mrf.mxu0
    %v89 = vadd.f32 0.0, %v88
    %90 = vmatmul.bf16.gmra.mxu0 %v75
    %v91 = vpop.f32.mrf.mxu0
    %v92 = vadd.f32 0.0, %v91
    %v93 = vpop.f32.mrf.mxu0
    %v94 = vadd.f32 0.0, %v93
    %95 = vdwg.mxu0
    %98 = vrot.lane.b32.xlu0 %v87, 4
    %v99 = vpop.permute.xlu0 %98
    %100 = vrot.lane.b32.xlu0 %v89, 4
    %v101 = vpop.permute.xlu0 %100
    %106 = vrot.lane.b32.xlu0 %v92, 8
    %v107 = vpop.permute.xlu0 %106
    %108 = vrot.lane.b32.xlu0 %v94, 8
    %v109 = vpop.permute.xlu0 %108
    %vm112 = vcmask 31744
    %v113 = vsel %vm112, %v48, %v99
    %v114 = vsel %vm112, %v49, %v101
    %vm115 = vcmask 64512
    %v116 = vsel %vm115, %v113, %v107
    %v117 = vsel %vm115, %v114, %v109
    %v118 = vpack.c.bf16 %v117, %v116
    %v119 = vld [vmem:[%s2] sm:$0xf]
    %v120 = vld [vmem:[%s2 + $0x4] sm:$0x3]
    %v121 = vld [vmem:[%s3] sm:$0x1]
    %v123 = vperm.slane %v121, 0
    %v127 = vunpack.c.l.b16 %v119
    %v128 = vunpack.c.l.b16 %v120
    %v129 = vpack.c.b16 %v128, %v127
    %vm130 = vcmask 97280
    %v132 = vsel %vm130, %v118, 0
    %vm134 = vcmask 1045504
    %v136 = vsel %vm134, %v129, 0
    %138 = vmatpush.bf16.msra.mxu0 0
    %139 = vmatpush.bf16.msra.mxu0 0
    %140 = vmatpush.bf16.msra.mxu0 0
    %141 = vmatpush.bf16.msra.mxu0 0
    %142 = vmatpush.bf16.msra.mxu0 0
    %143 = vmatpush.bf16.msra.mxu0 0
    %144 = vmatpush.bf16.msra.mxu0 0
    %145 = vmatpush.bf16.msra.mxu0 %v136
    %146 = vmatmul.bf16.gmra.mxu0 %v132
    %v147 = vpop.f32.mrf.mxu0
    %v148 = vadd.f32 %v123, %v147
    %v149 = vpop.f32.mrf.mxu0
    %v150 = vadd.f32 %v123, %v149
    %151 = vdwg.mxu0
    %v152 = vmax.f32 %v148, 0.0
    %v153 = vmax.f32 %v150, 0.0
    %v154 = vpack.c.bf16 %v153, %v152
    %155 = vmatpush.bf16.msra.mxu0 0
    %156 = vmatpush.bf16.msra.mxu0 0
    %157 = vmatpush.bf16.msra.mxu0 0
    %158 = vmatpush.bf16.msra.mxu0 0
    %159 = vmatpush.bf16.msra.mxu0 0
    %160 = vmatpush.bf16.msra.mxu0 0
    %161 = vmatpush.bf16.msra.mxu0 0
    %162 = vmatpush.bf16.msra.mxu0 %v154
    %163 = vmatmul.bf16.gmra.mxu0 %v72
    %v164 = vpop.f32.mrf.mxu0
    %v165 = vadd.f32 0.0, %v164
    %v166 = vpop.f32.mrf.mxu0
    %v167 = vadd.f32 0.0, %v166
    %168 = vmatmul.bf16.gmra.mxu0 %v75
    %v169 = vpop.f32.mrf.mxu0
    %v170 = vadd.f32 0.0, %v169
    %v171 = vpop.f32.mrf.mxu0
    %v172 = vadd.f32 0.0, %v171
    %173 = vdwg.mxu0
    %176 = vrot.lane.b32.xlu0 %v165, 32
    %v177 = vpop.permute.xlu0 %176
    %178 = vrot.lane.b32.xlu0 %v167, 32
    %v179 = vpop.permute.xlu0 %178
    %184 = vrot.lane.b32.xlu0 %v170, 64
    %v185 = vpop.permute.xlu0 %184
    %186 = vrot.lane.b32.xlu0 %v172, 64
    %v187 = vpop.permute.xlu0 %186
    %vm190 = vcmask 261120
    %v191 = vsel %vm190, %v152, %v177
    %v192 = vsel %vm190, %v153, %v179
    %vm193 = vcmask 523264
    %v194 = vsel %vm193, %v191, %v185
    %v195 = vsel %vm193, %v192, %v187
    %v196 = vpack.c.bf16 %v195, %v194
    %v197 = vld [vmem:[%s4] sm:$0xf]
    %v198 = vld [vmem:[%s4 + $0x4] sm:$0xf]
    %v199 = vld [vmem:[%s4 + $0x8] sm:$0xf]
    %v200 = vld [vmem:[%s4 + $0xc] sm:$0xf]
    %v201 = vld [vmem:[%s4 + $0x10] sm:$0xf]
    %v202 = vld [vmem:[%s4 + $0x14] sm:$0xf]
    %v203 = vld [vmem:[%s4 + $0x18] sm:$0xf]
    %v204 = vld [vmem:[%s4 + $0x1c] sm:$0xf]
    %v205 = vld [vmem:[%s4 + $0x20] sm:$0xf]
    %v206 = vld [vmem:[%s4 + $0x24] sm:$0xf]
    %v207 = vld [vmem:[%s4 + $0x28] sm:$0xf]
    %v208 = vld [vmem:[%s4 + $0x2c] sm:$0xf]
    %v209 = vld [vmem:[%s5] sm:$0x1]
    %v211 = vperm.slane %v209, 0
    %v225 = vunpack.c.l.b16 %v197
    %v226 = vunpack.c.l.b16 %v198
    %v227 = vunpack.c.l.b16 %v199
    %v228 = vunpack.c.l.b16 %v200
    %v229 = vunpack.c.l.b16 %v201
    %v230 = vunpack.c.l.b16 %v202
    %v231 = vunpack.c.l.b16 %v203
    %v232 = vunpack.c.l.b16 %v204
    %v233 = vunpack.c.l.b16 %v205
    %v234 = vunpack.c.l.b16 %v206
    %v235 = vunpack.c.l.b16 %v207
    %v236 = vunpack.c.l.b16 %v208
    %v237 = vpack.c.b16 %v226, %v225
    %v238 = vpack.c.b16 %v228, %v227
    %v239 = vpack.c.b16 %v230, %v229
    %v240 = vpack.c.b16 %v232, %v231
    %v241 = vpack.c.b16 %v234, %v233
    %v242 = vpack.c.b16 %v236, %v235
    %vm249 = vcmask 785408
    %v251 = vsel %vm249, %v196, 0
    %253 = vmatpush.bf16.msra.mxu0 0
    %254 = vmatpush.bf16.msra.mxu0 0
    %255 = vmatpush.bf16.msra.mxu0 %v242
    %256 = vmatpush.bf16.msra.mxu0 %v241
    %257 = vmatpush.bf16.msra.mxu0 %v240
    %258 = vmatpush.bf16.msra.mxu0 %v239
    %259 = vmatpush.bf16.msra.mxu0 %v238
    %260 = vmatpush.bf16.msra.mxu0 %v237
    %261 = vmatmul.bf16.gmra.mxu0 %v251
    %v262 = vpop.f32.mrf.mxu0
    %v263 = vadd.f32 %v211, %v262
    %v264 = vpop.f32.mrf.mxu0
    %v265 = vadd.f32 %v211, %v264
    %266 = vdwg.mxu0
    %v267 = vmax.f32 %v263, 0.0
    %v268 = vmax.f32 %v265, 0.0
    %v269 = vld [vmem:[%s6] sm:$0x3]
    %v270 = vperm.slane %v269, 0
    %v271 = vlaneseq
    %v272 = vshrl.u32 %v271, 7
    %274 = vset.pattern.permute.xlu0 %v272
    %275 = vperm.xlu0 %274, %v270
    %v276 = vpop.permute.xlu0 %275
    %v277 = vlaneseq
    %v278 = vshrl.u32 %v277, 7
    %v279 = vadd.s32 %v278, 8
    %280 = vset.pattern.permute.xlu0 %v279
    %281 = vperm.xlu0 %280, %v270
    %v282 = vpop.permute.xlu0 %281
    %v283 = vperm.slane %v269, 1
    %v284 = vlaneseq
    %v285 = vshrl.u32 %v284, 7
    %287 = vset.pattern.permute.xlu0 %v285
    %288 = vperm.xlu0 %287, %v283
    %v289 = vpop.permute.xlu0 %288
    %v290 = vlaneseq
    %v291 = vshrl.u32 %v290, 7
    %v292 = vadd.s32 %v291, 8
    %293 = vset.pattern.permute.xlu0 %v292
    %294 = vperm.xlu0 %293, %v283
    %v295 = vpop.permute.xlu0 %294
    %v296 = vmul.f32 %v276, %v267
    %v297 = vmul.f32 %v282, %v268
    %v298 = vmul.f32 %v289, %v267
    %v299 = vmul.f32 %v295, %v268
    %v300 = vsel %vm193, %v296, -inf
    %v301 = vsel %vm193, %v297, -inf
    %v302 = vmax.f32 %v300, %v301
    %v303 = vrot.slane %v302, 4
    %v304 = vmax.f32 %v302, %v303
    %v305 = vrot.slane %v304, 2
    %v306 = vmax.f32 %v304, %v305
    %v307 = vrot.slane %v306, 1
    %v308 = vmax.f32 %v306, %v307
    %v309 = vsel %vm193, %v298, -inf
    %v310 = vsel %vm193, %v299, -inf
    %v311 = vmax.f32 %v309, %v310
    %v312 = vrot.slane %v311, 4
    %v313 = vmax.f32 %v311, %v312
    %v314 = vrot.slane %v313, 2
    %v315 = vmax.f32 %v313, %v314
    %v316 = vrot.slane %v315, 1
    %v317 = vmax.f32 %v315, %v316
    %vm320 = vcmask 1041409
    %v321 = vsel %vm320, %v317, %v308
    %323 = vrot.lane.b32.xlu0 %v321, 64
    %v324 = vpop.permute.xlu0 %323
    %v326 = vsel %vm193, %v321, %v324
    %v327 = vld [vmem:[%s7] sm:$0x3]
    %v329 = vperm.slane %v327, 0
    %v330 = vperm.slane %v327, 1
    %v333 = vmul.f32 %v326, %v329
    %v334 = vmul.f32 %v326, %v330
    %v335 = vld [vmem:[%s8] sm:$0x3]
    %v337 = vperm.slane %v335, 0
    %v338 = vperm.slane %v335, 1
    %v341 = vadd.f32 %v333, %v337
    %v342 = vadd.f32 %v334, %v338
    %v343 = vpack.c.bf16 %v341, %v341
    %v344 = vpack.c.bf16 %v342, %v342
    %v345 = vld [vmem:[%s9] sm:$0xf]
    %v346 = vld [vmem:[%s9 + $0x4] sm:$0xf]
    %v347 = vld [vmem:[%s9 + $0x8] sm:$0xf]
    %v348 = vld [vmem:[%s9 + $0xc] sm:$0xf]
    %v349 = vld [vmem:[%s9 + $0x10] sm:$0xf]
    %v350 = vld [vmem:[%s9 + $0x14] sm:$0xf]
    %v351 = vld [vmem:[%s9 + $0x18] sm:$0xf]
    %v352 = vld [vmem:[%s9 + $0x1c] sm:$0xf]
    %v353 = vld [vmem:[%s9 + $0x20] sm:$0xf]
    %v354 = vld [vmem:[%s9 + $0x24] sm:$0xf]
    %v355 = vld [vmem:[%s9 + $0x28] sm:$0xf]
    %v356 = vld [vmem:[%s9 + $0x2c] sm:$0xf]
    %v357 = vld [vmem:[%s9 + $0x30] sm:$0xf]
    %v358 = vld [vmem:[%s9 + $0x34] sm:$0xf]
    %v359 = vld [vmem:[%s9 + $0x38] sm:$0xf]
    %v360 = vld [vmem:[%s9 + $0x3c] sm:$0xf]
    %v361 = vld [vmem:[%s9 + $0x40] sm:$0xf]
    %v362 = vld [vmem:[%s9 + $0x44] sm:$0xf]
    %v363 = vld [vmem:[%s9 + $0x48] sm:$0xf]
    %v364 = vld [vmem:[%s9 + $0x4c] sm:$0xf]
    %v365 = vld [vmem:[%s9 + $0x50] sm:$0xf]
    %v366 = vld [vmem:[%s9 + $0x54] sm:$0xf]
    %v367 = vld [vmem:[%s9 + $0x58] sm:$0xf]
    %v368 = vld [vmem:[%s9 + $0x5c] sm:$0xf]
    %v369 = vld [vmem:[%s9 + $0x60] sm:$0xf]
    %v370 = vld [vmem:[%s9 + $0x64] sm:$0xf]
    %v371 = vld [vmem:[%s9 + $0x68] sm:$0xf]
    %v372 = vld [vmem:[%s9 + $0x6c] sm:$0xf]
    %v373 = vld [vmem:[%s9 + $0x70] sm:$0xf]
    %v374 = vld [vmem:[%s9 + $0x74] sm:$0xf]
    %v375 = vld [vmem:[%s9 + $0x78] sm:$0xf]
    %v376 = vld [vmem:[%s9 + $0x7c] sm:$0xf]
    %v377 = vld [vmem:[%s10] sm:$0x1]
    %v379 = vperm.slane %v377, 0
    %v413 = vunpack.c.l.b16 %v345
    %v414 = vunpack.c.l.b16 %v346
    %v415 = vunpack.c.l.b16 %v347
    %v416 = vunpack.c.l.b16 %v348
    %v417 = vunpack.c.l.b16 %v349
    %v418 = vunpack.c.l.b16 %v350
    %v419 = vunpack.c.l.b16 %v351
    %v420 = vunpack.c.l.b16 %v352
    %v421 = vunpack.c.l.b16 %v353
    %v422 = vunpack.c.l.b16 %v354
    %v423 = vunpack.c.l.b16 %v355
    %v424 = vunpack.c.l.b16 %v356
    %v425 = vunpack.c.l.b16 %v357
    %v426 = vunpack.c.l.b16 %v358
    %v427 = vunpack.c.l.b16 %v359
    %v428 = vunpack.c.l.b16 %v360
    %v429 = vunpack.c.l.b16 %v361
    %v430 = vunpack.c.l.b16 %v362
    %v431 = vunpack.c.l.b16 %v363
    %v432 = vunpack.c.l.b16 %v364
    %v433 = vunpack.c.l.b16 %v365
    %v434 = vunpack.c.l.b16 %v366
    %v435 = vunpack.c.l.b16 %v367
    %v436 = vunpack.c.l.b16 %v368
    %v437 = vunpack.c.l.b16 %v369
    %v438 = vunpack.c.l.b16 %v370
    %v439 = vunpack.c.l.b16 %v371
    %v440 = vunpack.c.l.b16 %v372
    %v441 = vunpack.c.l.b16 %v373
    %v442 = vunpack.c.l.b16 %v374
    %v443 = vunpack.c.l.b16 %v375
    %v444 = vunpack.c.l.b16 %v376
    %v445 = vpack.c.b16 %v414, %v413
    %v446 = vpack.c.b16 %v416, %v415
    %v447 = vpack.c.b16 %v418, %v417
    %v448 = vpack.c.b16 %v420, %v419
    %v449 = vpack.c.b16 %v422, %v421
    %v450 = vpack.c.b16 %v424, %v423
    %v451 = vpack.c.b16 %v426, %v425
    %v452 = vpack.c.b16 %v428, %v427
    %v453 = vpack.c.b16 %v430, %v429
    %v454 = vpack.c.b16 %v432, %v431
    %v455 = vpack.c.b16 %v434, %v433
    %v456 = vpack.c.b16 %v436, %v435
    %v457 = vpack.c.b16 %v438, %v437
    %v458 = vpack.c.b16 %v440, %v439
    %v459 = vpack.c.b16 %v442, %v441
    %v460 = vpack.c.b16 %v444, %v443
    %477 = vmatpush.bf16.msra.mxu0 %v452
    %478 = vmatpush.bf16.msra.mxu0 %v451
    %479 = vmatpush.bf16.msra.mxu0 %v450
    %480 = vmatpush.bf16.msra.mxu0 %v449
    %481 = vmatpush.bf16.msra.mxu0 %v448
    %482 = vmatpush.bf16.msra.mxu0 %v447
    %483 = vmatpush.bf16.msra.mxu0 %v446
    %484 = vmatpush.bf16.msra.mxu0 %v445
    %485 = vmatmul.bf16.gmra.mxu0 %v343
    %v486 = vpop.f32.mrf.mxu0
    %v487 = vadd.f32 %v379, %v486
    %v488 = vpop.f32.mrf.mxu0
    %489 = vdwg.mxu0
    %490 = vmatpush.bf16.msra.mxu0 %v460
    %491 = vmatpush.bf16.msra.mxu0 %v459
    %492 = vmatpush.bf16.msra.mxu0 %v458
    %493 = vmatpush.bf16.msra.mxu0 %v457
    %494 = vmatpush.bf16.msra.mxu0 %v456
    %495 = vmatpush.bf16.msra.mxu0 %v455
    %496 = vmatpush.bf16.msra.mxu0 %v454
    %497 = vmatpush.bf16.msra.mxu0 %v453
    %498 = vmatmul.bf16.gmra.mxu0 %v344
    %v499 = vpop.f32.mrf.mxu0
    %v500 = vadd.f32 %v487, %v499
    %v501 = vpop.f32.mrf.mxu0
    %502 = vdwg.mxu0
    %v503 = vmax.f32 %v500, 0.0
    %v504 = vpack.c.bf16 %v503, %v503
    %v505 = vld [vmem:[%s11] sm:$0xf]
    %v506 = vld [vmem:[%s11 + $0x4] sm:$0xf]
    %v507 = vld [vmem:[%s11 + $0x8] sm:$0xf]
    %v508 = vld [vmem:[%s11 + $0xc] sm:$0xf]
    %v509 = vld [vmem:[%s11 + $0x10] sm:$0xf]
    %v510 = vld [vmem:[%s11 + $0x14] sm:$0xf]
    %v511 = vld [vmem:[%s11 + $0x18] sm:$0xf]
    %v512 = vld [vmem:[%s11 + $0x1c] sm:$0xf]
    %v513 = vld [vmem:[%s11 + $0x20] sm:$0xf]
    %v514 = vld [vmem:[%s11 + $0x24] sm:$0xf]
    %v515 = vld [vmem:[%s11 + $0x28] sm:$0xf]
    %v516 = vld [vmem:[%s11 + $0x2c] sm:$0xf]
    %v517 = vld [vmem:[%s11 + $0x30] sm:$0xf]
    %v518 = vld [vmem:[%s11 + $0x34] sm:$0xf]
    %v519 = vld [vmem:[%s11 + $0x38] sm:$0xf]
    %v520 = vld [vmem:[%s11 + $0x3c] sm:$0xf]
    %v521 = vld [vmem:[%s12] sm:$0x1]
    %v523 = vperm.slane %v521, 0
    %v541 = vunpack.c.l.b16 %v505
    %v542 = vunpack.c.l.b16 %v506
    %v543 = vunpack.c.l.b16 %v507
    %v544 = vunpack.c.l.b16 %v508
    %v545 = vunpack.c.l.b16 %v509
    %v546 = vunpack.c.l.b16 %v510
    %v547 = vunpack.c.l.b16 %v511
    %v548 = vunpack.c.l.b16 %v512
    %v549 = vunpack.c.l.b16 %v513
    %v550 = vunpack.c.l.b16 %v514
    %v551 = vunpack.c.l.b16 %v515
    %v552 = vunpack.c.l.b16 %v516
    %v553 = vunpack.c.l.b16 %v517
    %v554 = vunpack.c.l.b16 %v518
    %v555 = vunpack.c.l.b16 %v519
    %v556 = vunpack.c.l.b16 %v520
    %v557 = vpack.c.b16 %v542, %v541
    %v558 = vpack.c.b16 %v544, %v543
    %v559 = vpack.c.b16 %v546, %v545
    %v560 = vpack.c.b16 %v548, %v547
    %v561 = vpack.c.b16 %v550, %v549
    %v562 = vpack.c.b16 %v552, %v551
    %v563 = vpack.c.b16 %v554, %v553
    %v564 = vpack.c.b16 %v556, %v555
    %573 = vmatpush.bf16.msra.mxu0 %v564
    %574 = vmatpush.bf16.msra.mxu0 %v563
    %575 = vmatpush.bf16.msra.mxu0 %v562
    %576 = vmatpush.bf16.msra.mxu0 %v561
    %577 = vmatpush.bf16.msra.mxu0 %v560
    %578 = vmatpush.bf16.msra.mxu0 %v559
    %579 = vmatpush.bf16.msra.mxu0 %v558
    %580 = vmatpush.bf16.msra.mxu0 %v557
    %581 = vmatmul.bf16.gmra.mxu0 %v504
    %v582 = vpop.f32.mrf.mxu0
    %v583 = vadd.f32 %v523, %v582
    %v584 = vpop.f32.mrf.mxu0
    %585 = vdwg.mxu0
    %586 = vst [vmem:[#allocation2] sm:$0x3] %v583
    // Predicated region
    $region54: #{gcn_branch_forward.1} parent=1 // pred_check
      _
    $region55: #{gcn_branch_forward.1} parent=1 // pred_check_branch
      %588 = sbr.rel (0) target = $region57
    $region56: #{gcn_branch_forward.1} parent=1 // pred_region
      %590 = vsyncadd [#allocation3], 0
      %s592 = sshll.u32 [#allocation2], 4
      %s593 = int_to_ptr.vmem [resolvable:$true] %s592
      %s594 = sshll.u32 %s13, 4
      %s595 = int_to_ptr.hbm [resolvable:$true] %s594
      %597 = dma.vmem_to_hbm [thread:$0]  %s593, 32, %s595, [#allocation3]
    $region57: #{gcn_branch_forward.1} parent=1 // pred_fallthru
      _
    // Predicated region
    $region58: #{gcn_branch_forward.1} parent=1 // pred_check
      _
    $region59: #{gcn_branch_forward.1} parent=1 // pred_check_branch
      %599 = sbr.rel (0) target = $region61
    $region60: #{gcn_branch_forward.1} parent=1 // pred_region
      %601 = dma.done [#allocation3], 32
    $region61: #{gcn_branch_forward.1} parent=1 // pred_fallthru
      _
    %602 = vsyncpa [#allocation3], 1

</llo_original>
